<compile_context>
chip_gen: v7x
topology: tpu7x:2x2x1
jax: 0.10.0
libtpu: 0.0.40
codegen_flags: <defaults>
</compile_context>

<pallas_src>
import functools

import jax
import jax.numpy as jnp
from jax.experimental import pallas as pl
from jax.experimental.pallas import tpu as pltpu

MARGIN = 2.0          # module default
PAIRWISE_EPS = 1e-6   # F.pairwise_distance default eps


def _row_nll(logits, labels_col):
    """Per-row NLL column (TB, 1); logits (TB, C) f32, labels_col (TB, 1) i32."""
    m = jnp.max(logits, axis=-1, keepdims=True)
    z = logits - m
    lse = jnp.log(jnp.sum(jnp.exp(z), axis=-1, keepdims=True))            # (TB, 1)
    cls = jax.lax.broadcasted_iota(jnp.int32, logits.shape, 1)            # class ids
    picked = jnp.sum(jnp.where(cls == labels_col, z, 0.0),
                     axis=-1, keepdims=True)                              # (TB, 1)
    return lse - picked


def _contrastive_kernel(f1_ref, lg1_ref, lab1_ref,
                        f2_ref, lg2_ref, lab2_ref, out_ref, *, tb, batch):
    f1 = f1_ref[...].astype(jnp.float32)
    f2 = f2_ref[...].astype(jnp.float32)
    lg1 = lg1_ref[...].astype(jnp.float32)
    lg2 = lg2_ref[...].astype(jnp.float32)
    lab1 = lab1_ref[...]
    lab2 = lab2_ref[...]

    # fused per-row column: nll1 + nll2 + contrastive term (single reduction)
    per_row = _row_nll(lg1, lab1) + _row_nll(lg2, lab2)                   # (TB, 1)

    same = (lab1 == lab2).astype(jnp.float32)                             # (TB, 1)
    diff = f1 - f2 + PAIRWISE_EPS
    d2 = jnp.sum(diff * diff, axis=-1, keepdims=True)                     # (TB, 1)
    d = jnp.sqrt(d2)                                                      # EUP slot
    hinge = jnp.maximum(MARGIN - d, 0.0)
    per_row = per_row + (1.0 - same) * d2 + same * (hinge * hinge)

    # mask padded tail rows of the last tile out of the reduction
    row = pl.program_id(0) * tb + jax.lax.broadcasted_iota(jnp.int32, (tb, 1), 0)
    per_row = jnp.where(row < batch, per_row, 0.0)

    partial = jnp.sum(per_row)
    # broadcast the scalar partial into a full-vreg (1, 8, 128) output block
    out_ref[...] = jnp.full(out_ref.shape, partial, dtype=jnp.float32)


def _vmem_limit_bytes():
    """Scoped-VMEM limit with per-generation headroom (v7x ~48MiB, v5e/v6e ~96MiB)."""
    try:
        cap = int(pltpu.get_tpu_info().vmem_capacity_bytes)
    except Exception:
        cap = 64 * 1024 * 1024  # conservative fallback, safe on all generations
    return min(cap * 3 // 4, 100 * 1024 * 1024)


def _pick_tile(B, D, C, tile_budget_bytes):
    """Batch-tile rows from a VMEM byte budget (multiple of 8, <= 2048)."""
    if B <= 8:
        return B  # single full-batch block (block dims == full array dims)
    # f32/i32 bytes resident in VMEM per batch row:
    #   * double-buffered inputs: 2 streams x (D + C) plus two label columns
    #     that lane-pad to 128, all x 2 pipeline buffers
    #   * in-kernel temporaries (z / exp / where-select for two logsumexps,
    #     feature diff, per-row columns)
    per_row = 4 * (2 * 2 * (D + C + 128) + 8 * C + 4 * D + 32)
    tb = tile_budget_bytes // per_row
    tb = int(tb) // 8 * 8
    tb = max(8, min(tb, 2048))
    # keep both v7x TensorCores busy: guarantee >= 2 grid steps
    if tb >= B:
        tb = max(8, (((B + 1) // 2) // 8) * 8)
    return tb


def contrastive_loss(features1, logits1, label1, features2, logits2, label2):
    B, D = features1.shape
    _, C = logits1.shape
    l1 = label1.astype(jnp.int32).reshape(B, 1)
    l2 = label2.astype(jnp.int32).reshape(B, 1)

    vmem_limit = _vmem_limit_bytes()
    TB = _pick_tile(B, D, C, vmem_limit // 2)
    num_tiles = (B + TB - 1) // TB

    in_bytes = (2 * features1.size * features1.dtype.itemsize
                + 2 * logits1.size * logits1.dtype.itemsize
                + 2 * B * 4)
    cost = pl.CostEstimate(
        flops=int(2 * B * (3 * D + 4 * C) + 16 * B),
        transcendentals=int(2 * B * C + 3 * B),
        bytes_accessed=int(in_bytes + num_tiles * 8 * 128 * 4),
    )

    kernel = functools.partial(_contrastive_kernel, tb=TB, batch=B)

    partials = pl.pallas_call(
        kernel,
        out_shape=jax.ShapeDtypeStruct((num_tiles, 8, 128), jnp.float32),
        grid=(num_tiles,),
        in_specs=[
            pl.BlockSpec((TB, D), lambda i: (i, 0)),   # features1
            pl.BlockSpec((TB, C), lambda i: (i, 0)),   # logits1
            pl.BlockSpec((TB, 1), lambda i: (i, 0)),   # label1 column
            pl.BlockSpec((TB, D), lambda i: (i, 0)),   # features2
            pl.BlockSpec((TB, C), lambda i: (i, 0)),   # logits2
            pl.BlockSpec((TB, 1), lambda i: (i, 0)),   # label2 column
        ],
        out_specs=pl.BlockSpec((1, 8, 128), lambda i: (i, 0, 0)),
        compiler_params=pltpu.CompilerParams(
            dimension_semantics=("parallel",),
            vmem_limit_bytes=vmem_limit),
        cost_estimate=cost,
    )(features1, logits1, l1, features2, logits2, l2)

    # tiny final reduction + the single 1/B normalization (mean applied once)
    return jnp.sum(partials[:, 0, 0]) * (1.0 / B)


def _reference(f1, lg1, l1, f2, lg2, l2, margin=MARGIN):
    """Pure-JAX replica of the PyTorch forward, for verification."""
    def ce(lg, lab):
        lse = jax.scipy.special.logsumexp(lg, axis=-1)
        picked = jnp.take_along_axis(lg, lab[:, None], axis=-1)[:, 0]
        return jnp.mean(lse - picked)
    d = jnp.sqrt(jnp.sum((f1 - f2 + PAIRWISE_EPS) ** 2, axis=-1))
    same = (l1 == l2).astype(jnp.float32)
    lc = jnp.mean((1.0 - same) * d ** 2 + same * jnp.clip(margin - d, 0.0) ** 2)
    return ce(lg1, l1) + ce(lg2, l2) + lc


if __name__ == "__main__":
    C, D = 10, 32   # num classes, feature dim

    def make_inputs(key, B):
        k1, k2, k3, k4, k5, k6 = jax.random.split(key, 6)
        return (jax.random.normal(k1, (B, D), dtype=jnp.float32),
                jax.random.normal(k3, (B, C), dtype=jnp.float32),
                jax.random.randint(k5, (B,), 0, C, dtype=jnp.int32),
                jax.random.normal(k2, (B, D), dtype=jnp.float32),
                jax.random.normal(k4, (B, C), dtype=jnp.float32),
                jax.random.randint(k6, (B,), 0, C, dtype=jnp.int32))

    base = jax.random.PRNGKey(0)
    # B=8: single full-batch tile; B=20: exercises cdiv grid + tail-row masking
    for B in (8, 20):
        args = make_inputs(jax.random.fold_in(base, B), B)
        loss = jax.block_until_ready(contrastive_loss(*args))
        ref = _reference(*args)
        assert jnp.allclose(loss, ref, rtol=1e-5, atol=1e-5), (B, loss, ref)

    print("KERNEL_OK")
</pallas_src>

<mosaic_0001>
module attributes {stable_mosaic.version = 11 : i64} {
  func.func @_contrastive_kernel(%arg0: i32, %arg1: memref<8x32xf32, #tpu.memory_space<vmem>>, %arg2: memref<8x10xf32, #tpu.memory_space<vmem>>, %arg3: memref<8x1xi32, #tpu.memory_space<vmem>>, %arg4: memref<8x32xf32, #tpu.memory_space<vmem>>, %arg5: memref<8x10xf32, #tpu.memory_space<vmem>>, %arg6: memref<8x1xi32, #tpu.memory_space<vmem>>, %arg7: memref<1x8x128xf32, #tpu.memory_space<vmem>>) attributes {dimension_semantics = [#tpu.dimension_semantics<parallel>], iteration_bounds = array<i64: 1>, scalar_prefetch = 0 : i64, scratch_operands = 0 : i64, tpu.core_type = #tpu.core_type<tc>, window_params = [{transform_indices = @transform_0, window_bounds = array<i64: 8, 32>}, {transform_indices = @transform_1, window_bounds = array<i64: 8, 10>}, {transform_indices = @transform_2, window_bounds = array<i64: 8, 1>}, {transform_indices = @transform_3, window_bounds = array<i64: 8, 32>}, {transform_indices = @transform_4, window_bounds = array<i64: 8, 10>}, {transform_indices = @transform_5, window_bounds = array<i64: 8, 1>}, {transform_indices = @transform_6, window_bounds = array<i64: 1, 8, 128>}]} {
    %c0 = arith.constant 0 : index
    %c0_0 = arith.constant 0 : index
    %0 = vector.load %arg1[%c0, %c0_0] : memref<8x32xf32, #tpu.memory_space<vmem>>, vector<8x32xf32>
    %c0_1 = arith.constant 0 : index
    %c0_2 = arith.constant 0 : index
    %1 = vector.load %arg4[%c0_1, %c0_2] : memref<8x32xf32, #tpu.memory_space<vmem>>, vector<8x32xf32>
    %c0_3 = arith.constant 0 : index
    %c0_4 = arith.constant 0 : index
    %2 = vector.load %arg2[%c0_3, %c0_4] : memref<8x10xf32, #tpu.memory_space<vmem>>, vector<8x10xf32>
    %c0_5 = arith.constant 0 : index
    %c0_6 = arith.constant 0 : index
    %3 = vector.load %arg5[%c0_5, %c0_6] : memref<8x10xf32, #tpu.memory_space<vmem>>, vector<8x10xf32>
    %c0_7 = arith.constant 0 : index
    %c0_8 = arith.constant 0 : index
    %4 = vector.load %arg3[%c0_7, %c0_8] : memref<8x1xi32, #tpu.memory_space<vmem>>, vector<8x1xi32>
    %c0_9 = arith.constant 0 : index
    %c0_10 = arith.constant 0 : index
    %5 = vector.load %arg6[%c0_9, %c0_10] : memref<8x1xi32, #tpu.memory_space<vmem>>, vector<8x1xi32>
    %cst = arith.constant dense<0xFF800000> : vector<8xf32>
    %6 = vector.multi_reduction <maximumf>, %2, %cst [1] : vector<8x10xf32> to vector<8xf32>
    %7 = vector.shape_cast %6 : vector<8xf32> to vector<8x1xf32>
    %8 = vector.broadcast %7 : vector<8x1xf32> to vector<8x10xf32>
    %9 = arith.subf %2, %8 : vector<8x10xf32>
    %10 = math.exp %9 : vector<8x10xf32>
    %cst_11 = arith.constant dense<0.000000e+00> : vector<8xf32>
    %11 = vector.multi_reduction <add>, %10, %cst_11 [1] : vector<8x10xf32> to vector<8xf32>
    %12 = vector.shape_cast %11 : vector<8xf32> to vector<8x1xf32>
    %13 = math.log %12 : vector<8x1xf32>
    %14 = tpu.iota {dimensions = array<i32: 1>} : vector<8x10xi32>
    %15 = vector.broadcast %4 : vector<8x1xi32> to vector<8x10xi32>
    %16 = arith.cmpi eq, %14, %15 : vector<8x10xi32>
    %cst_12 = arith.constant 0.000000e+00 : f32
    %17 = vector.broadcast %cst_12 : f32 to vector<8x10xf32>
    %18 = arith.select %16, %9, %17 : vector<8x10xi1>, vector<8x10xf32>
    %cst_13 = arith.constant dense<0.000000e+00> : vector<8xf32>
    %19 = vector.multi_reduction <add>, %18, %cst_13 [1] : vector<8x10xf32> to vector<8xf32>
    %20 = vector.shape_cast %19 : vector<8xf32> to vector<8x1xf32>
    %21 = arith.subf %13, %20 : vector<8x1xf32>
    %cst_14 = arith.constant dense<0xFF800000> : vector<8xf32>
    %22 = vector.multi_reduction <maximumf>, %3, %cst_14 [1] : vector<8x10xf32> to vector<8xf32>
    %23 = vector.shape_cast %22 : vector<8xf32> to vector<8x1xf32>
    %24 = vector.broadcast %23 : vector<8x1xf32> to vector<8x10xf32>
    %25 = arith.subf %3, %24 : vector<8x10xf32>
    %26 = math.exp %25 : vector<8x10xf32>
    %cst_15 = arith.constant dense<0.000000e+00> : vector<8xf32>
    %27 = vector.multi_reduction <add>, %26, %cst_15 [1] : vector<8x10xf32> to vector<8xf32>
    %28 = vector.shape_cast %27 : vector<8xf32> to vector<8x1xf32>
    %29 = math.log %28 : vector<8x1xf32>
    %30 = tpu.iota {dimensions = array<i32: 1>} : vector<8x10xi32>
    %31 = vector.broadcast %5 : vector<8x1xi32> to vector<8x10xi32>
    %32 = arith.cmpi eq, %30, %31 : vector<8x10xi32>
    %cst_16 = arith.constant 0.000000e+00 : f32
    %33 = vector.broadcast %cst_16 : f32 to vector<8x10xf32>
    %34 = arith.select %32, %25, %33 : vector<8x10xi1>, vector<8x10xf32>
    %cst_17 = arith.constant dense<0.000000e+00> : vector<8xf32>
    %35 = vector.multi_reduction <add>, %34, %cst_17 [1] : vector<8x10xf32> to vector<8xf32>
    %36 = vector.shape_cast %35 : vector<8xf32> to vector<8x1xf32>
    %37 = arith.subf %29, %36 : vector<8x1xf32>
    %38 = arith.addf %21, %37 : vector<8x1xf32>
    %39 = arith.cmpi eq, %4, %5 : vector<8x1xi32>
    %40 = arith.extui %39 : vector<8x1xi1> to vector<8x1xi32>
    %41 = arith.sitofp %40 : vector<8x1xi32> to vector<8x1xf32>
    %42 = arith.subf %0, %1 : vector<8x32xf32>
    %cst_18 = arith.constant 9.99999997E-7 : f32
    %43 = vector.broadcast %cst_18 : f32 to vector<8x32xf32>
    %44 = arith.addf %42, %43 : vector<8x32xf32>
    %45 = arith.mulf %44, %44 : vector<8x32xf32>
    %cst_19 = arith.constant dense<0.000000e+00> : vector<8xf32>
    %46 = vector.multi_reduction <add>, %45, %cst_19 [1] : vector<8x32xf32> to vector<8xf32>
    %47 = vector.shape_cast %46 : vector<8xf32> to vector<8x1xf32>
    %48 = math.sqrt %47 : vector<8x1xf32>
    %cst_20 = arith.constant 2.000000e+00 : f32
    %49 = vector.broadcast %cst_20 : f32 to vector<8x1xf32>
    %50 = arith.subf %49, %48 : vector<8x1xf32>
    %cst_21 = arith.constant 0.000000e+00 : f32
    %51 = vector.broadcast %cst_21 : f32 to vector<8x1xf32>
    %52 = arith.maximumf %50, %51 : vector<8x1xf32>
    %cst_22 = arith.constant 1.000000e+00 : f32
    %53 = vector.broadcast %cst_22 : f32 to vector<8x1xf32>
    %54 = arith.subf %53, %41 : vector<8x1xf32>
    %55 = arith.mulf %54, %47 : vector<8x1xf32>
    %56 = arith.addf %38, %55 : vector<8x1xf32>
    %57 = arith.mulf %52, %52 : vector<8x1xf32>
    %58 = arith.mulf %41, %57 : vector<8x1xf32>
    %59 = arith.addf %56, %58 : vector<8x1xf32>
    %c8_i32 = arith.constant 8 : i32
    %60 = arith.muli %arg0, %c8_i32 : i32
    %61 = tpu.iota {dimensions = array<i32: 0>} : vector<8x1xi32>
    %62 = vector.broadcast %60 : i32 to vector<8x1xi32>
    %63 = arith.addi %62, %61 : vector<8x1xi32>
    %c8_i32_23 = arith.constant 8 : i32
    %64 = vector.broadcast %c8_i32_23 : i32 to vector<8x1xi32>
    %65 = arith.cmpi slt, %63, %64 : vector<8x1xi32>
    %cst_24 = arith.constant 0.000000e+00 : f32
    %66 = vector.broadcast %cst_24 : f32 to vector<8x1xf32>
    %67 = arith.select %65, %59, %66 : vector<8x1xi1>, vector<8x1xf32>
    %68 = vector.shape_cast %67 : vector<8x1xf32> to vector<1x8x1xf32>
    %cst_25 = arith.constant dense<0.000000e+00> : vector<1xf32>
    %69 = vector.multi_reduction <add>, %68, %cst_25 [1, 2] : vector<1x8x1xf32> to vector<1xf32>
    %70 = vector.shape_cast %69 : vector<1xf32> to vector<1x1x1xf32>
    %71 = vector.extract %70[0, 0, 0] : f32 from vector<1x1x1xf32>
    %72 = vector.broadcast %71 : f32 to vector<1x8x128xf32>
    %c0_26 = arith.constant 0 : index
    %c0_27 = arith.constant 0 : index
    %c0_28 = arith.constant 0 : index
    %73 = vector.load %arg7[%c0_26, %c0_27, %c0_28] : memref<1x8x128xf32, #tpu.memory_space<vmem>>, vector<1x8x128xf32>
    tpu.vector_store %arg7[%c0_26, %c0_27, %c0_28], %72 {strides = array<i32>} : memref<1x8x128xf32, #tpu.memory_space<vmem>>, vector<1x8x128xf32>,
    return
  }
  func.func @transform_0(%arg0: i32) -> (i32, i32) {
    %c0_i32 = arith.constant 0 : i32
    %c0_i32_0 = arith.constant 0 : i32
    return %arg0, %c0_i32 : i32, i32
  }
  func.func @transform_1(%arg0: i32) -> (i32, i32) {
    %c0_i32 = arith.constant 0 : i32
    %c0_i32_0 = arith.constant 0 : i32
    return %arg0, %c0_i32 : i32, i32
  }
  func.func @transform_2(%arg0: i32) -> (i32, i32) {
    %c0_i32 = arith.constant 0 : i32
    %c0_i32_0 = arith.constant 0 : i32
    return %arg0, %c0_i32 : i32, i32
  }
  func.func @transform_3(%arg0: i32) -> (i32, i32) {
    %c0_i32 = arith.constant 0 : i32
    %c0_i32_0 = arith.constant 0 : i32
    return %arg0, %c0_i32 : i32, i32
  }
  func.func @transform_4(%arg0: i32) -> (i32, i32) {
    %c0_i32 = arith.constant 0 : i32
    %c0_i32_0 = arith.constant 0 : i32
    return %arg0, %c0_i32 : i32, i32
  }
  func.func @transform_5(%arg0: i32) -> (i32, i32) {
    %c0_i32 = arith.constant 0 : i32
    %c0_i32_0 = arith.constant 0 : i32
    return %arg0, %c0_i32 : i32, i32
  }
  func.func @transform_6(%arg0: i32) -> (i32, i32, i32) {
    %c0_i32 = arith.constant 0 : i32
    %c0_i32_0 = arith.constant 0 : i32
    %c0_i32_1 = arith.constant 0 : i32
    return %arg0, %c0_i32, %c0_i32_0 : i32, i32, i32
  }
}

</mosaic_0001>

<llo_original>
// kernel: tpu_custom_call.1
$region0: #{tpu_custom_call.1}
  #allocation0 [shape = 'u32[]', space=smem, size = 0x4, offset = 0x4, fixed_abs, tag = 'smem constant byte address 0x4 - core index']
  #allocation1 [shape = 'u32[144,128]{1,0:T(1,128)}', space=vmem, size = 0x12000, scoped, tag = 'internal scratch']
  %s0 = inlined_call_operand.vmem [shape: f32[8,32], index: 0, kind: input, shape index: {}]
  %s1 = inlined_call_operand.vmem [shape: f32[8,10], index: 1, kind: input, shape index: {}]
  %s2 = inlined_call_operand.vmem [shape: s32[8,1], index: 2, kind: input, shape index: {}]
  %s3 = inlined_call_operand.vmem [shape: f32[8,32], index: 3, kind: input, shape index: {}]
  %s4 = inlined_call_operand.vmem [shape: f32[8,10], index: 4, kind: input, shape index: {}]
  %s5 = inlined_call_operand.vmem [shape: s32[8,1], index: 5, kind: input, shape index: {}]
  %s6 = inlined_call_operand.hbm [shape: f32[1,8,128], index: 6, kind: output, shape index: {}]
  %s7 = sld [smem:[#allocation0]]
  $region34: #{tpu_custom_call.1} parent=0
    _
  %s9 = ssub.s32 1, %s7
  %s10 = scalar_select 0, %s9, %s7
  $region1: #{tpu_custom_call.1} parent=0
    #allocation2 [shape = 'u8[4096]{0}', space=vmem, size = 0x1000, scoped, tag = 'output window, operand 0, single buffered']
    #allocation3 [shape = 's32[1]{0}', space=sflag, size = 0x4, scoped, tag = 'scoped memory for tpu_custom_call.1']
    %11 = vsyncpa [#allocation3], 0
    // Predicated region
    $region2: #{tpu_custom_call.1} parent=1 // pred_check
      _
    $region3: #{tpu_custom_call.1} parent=1 // pred_check_branch
      %13 = sbr.rel (0) target = $region5
    $region4: #{tpu_custom_call.1} parent=1 // pred_region
      _
    $region5: #{tpu_custom_call.1} parent=1 // pred_fallthru
      _
    // Predicated region
    $region6: #{tpu_custom_call.1} parent=1 // pred_check
      _
    $region7: #{tpu_custom_call.1} parent=1 // pred_check_branch
      %15 = sbr.rel (0) target = $region9
    $region8: #{tpu_custom_call.1} parent=1 // pred_region
      _
    $region9: #{tpu_custom_call.1} parent=1 // pred_fallthru
      _
    // Predicated region
    $region10: #{tpu_custom_call.1} parent=1 // pred_check
      _
    $region11: #{tpu_custom_call.1} parent=1 // pred_check_branch
      %17 = sbr.rel (0) target = $region13
    $region12: #{tpu_custom_call.1} parent=1 // pred_region
      _
    $region13: #{tpu_custom_call.1} parent=1 // pred_fallthru
      _
    // Predicated region
    $region14: #{tpu_custom_call.1} parent=1 // pred_check
      _
    $region15: #{tpu_custom_call.1} parent=1 // pred_check_branch
      %19 = sbr.rel (0) target = $region17
    $region16: #{tpu_custom_call.1} parent=1 // pred_region
      _
    $region17: #{tpu_custom_call.1} parent=1 // pred_fallthru
      _
    // Predicated region
    $region18: #{tpu_custom_call.1} parent=1 // pred_check
      _
    $region19: #{tpu_custom_call.1} parent=1 // pred_check_branch
      %21 = sbr.rel (0) target = $region21
    $region20: #{tpu_custom_call.1} parent=1 // pred_region
      _
    $region21: #{tpu_custom_call.1} parent=1 // pred_fallthru
      _
    // Predicated region
    $region22: #{tpu_custom_call.1} parent=1 // pred_check
      _
    $region23: #{tpu_custom_call.1} parent=1 // pred_check_branch
      %23 = sbr.rel (0) target = $region25
    $region24: #{tpu_custom_call.1} parent=1 // pred_region
      _
    $region25: #{tpu_custom_call.1} parent=1 // pred_fallthru
      _
    %v24 = vld [vmem:[%s0] sm:$0xff]
    %v25 = vld [vmem:[%s3] sm:$0xff]
    %v26 = vld [vmem:[%s1] sm:$0xff]
    %v27 = vld [vmem:[%s4] sm:$0xff]
    %v28 = vld [vmem:[%s2] sm:$0xff]
    %v29 = vld [vmem:[%s5] sm:$0xff]
    %vm30 = vcmask 80896
    %v31 = vsel %vm30, %v26, -inf
    %32 = vmax.xlane.f32.xlu0 %v31
    %v33 = vpop.xlane.xlu0 %32
    %v34 = vsub.f32 %v26, %v33
    %v35 = vmul.f32 %v34, 1.442695
    %v36 = vpow.pop %v35
    %v37 = vsel %vm30, %v36, 0.0
    %38 = vadd.xlane.f32.xlu0 %v37
    %v39 = vpop.xlane.xlu0 %38
    %v40 = vlog2.pop %v39
    %v41 = vmul.f32 %v40, 0.6931472
    %v42 = vlaneseq
    %v43 = vand.u32 %v42, 127
    %44 = vset.pattern.permute.xlu0 0
    %45 = vperm.xlu0 %44, %v28
    %v46 = vpop.permute.xlu0 %45
    %vm47 = vcmp.eq.s32.totalorder %v43, %v46
    %v48 = vsel %vm47, %v34, 0.0
    %v49 = vsel %vm30, %v48, 0.0
    %50 = vadd.xlane.f32.xlu0 %v49
    %v51 = vpop.xlane.xlu0 %50
    %v52 = vsub.f32 %v41, %v51
    %v53 = vsel %vm30, %v27, -inf
    %54 = vmax.xlane.f32.xlu0 %v53
    %v55 = vpop.xlane.xlu0 %54
    %v56 = vsub.f32 %v27, %v55
    %v57 = vmul.f32 %v56, 1.442695
    %v58 = vpow.pop %v57
    %v59 = vsel %vm30, %v58, 0.0
    %60 = vadd.xlane.f32.xlu0 %v59
    %v61 = vpop.xlane.xlu0 %60
    %v62 = vlog2.pop %v61
    %v63 = vmul.f32 %v62, 0.6931472
    %64 = vset.pattern.permute.xlu0 0
    %65 = vperm.xlu0 %64, %v29
    %v66 = vpop.permute.xlu0 %65
    %vm67 = vcmp.eq.s32.totalorder %v43, %v66
    %v68 = vsel %vm67, %v56, 0.0
    %v69 = vsel %vm30, %v68, 0.0
    %70 = vadd.xlane.f32.xlu0 %v69
    %v71 = vpop.xlane.xlu0 %70
    %v72 = vsub.f32 %v63, %v71
    %v73 = vadd.f32 %v52, %v72
    %vm74 = vcmp.eq.s32.totalorder %v28, %v29
    %v75 = vsel %vm74, 1, 0
    %v76 = vcvt.s32.f32 %v75
    %v77 = vsub.f32 %v24, %v25
    %v78 = vadd.f32 %v77, 1e-06
    %v79 = vmul.f32 %v78, %v78
    %vm80 = vcmask 261120
    %v81 = vsel %vm80, %v79, 0.0
    %82 = vadd.xlane.f32.xlu0 %v81
    %v83 = vpop.xlane.xlu0 %82
    %v84 = vrsqrt.pop %v83
    %v85 = vmul.f32 %v83, %v84
    %vm86 = vcmp.eq.f32.partialorder %v83, inf
    %v87 = vsel %vm86, %v83, %v85
    %vm88 = vcmp.eq.f32.partialorder %v83, 0.0
    %v89 = vand.u32 %v83, 2147483648
    %v90 = vsel %vm88, %v89, %v87
    %v91 = vsub.f32 2.0, %v90
    %v92 = vmax.f32 %v91, 0.0
    %v93 = vsub.f32 1.0, %v76
    %v94 = vmul.f32 %v93, %v83
    %v95 = vadd.f32 %v73, %v94
    %v96 = vmul.f32 %v92, %v92
    %v97 = vmul.f32 %v76, %v96
    %v98 = vadd.f32 %v95, %v97
    %s99 = smul.u32 0, 8
    %v100 = vlaneseq
    %v101 = vshrl.u32 %v100, 7
    %v102 = vstv %s99
    %v103 = vadd.s32 %v102, %v101
    %vm104 = vcmp.lt.s32.totalorder %v103, 8
    %v105 = vsel %vm104, %v98, 0.0
    %vm106 = vcmask 7168
    %v107 = vsel %vm106, %v105, 0.0
    %108 = vadd.xlane.f32.xlu0 %v107
    %v109 = vpop.xlane.xlu0 %108
    %v110 = vrot.slane %v109, 4
    %v111 = vadd.f32 %v109, %v110
    %v112 = vrot.slane %v111, 2
    %v113 = vadd.f32 %v111, %v112
    %v114 = vrot.slane %v113, 1
    %v115 = vadd.f32 %v113, %v114
    %s116 = vtos %v115
    %v117 = vstv %s116
    %118 = vst [vmem:[#allocation2] sm:$0xff] %v117
    // Predicated region
    $region26: #{tpu_custom_call.1} parent=1 // pred_check
      _
    $region27: #{tpu_custom_call.1} parent=1 // pred_check_branch
      %120 = sbr.rel (0) target = $region29
    $region28: #{tpu_custom_call.1} parent=1 // pred_region
      %s122 = ssub.s32 128, 128
      %123 = vsyncadd [#allocation3], %s122
      %s125 = sshll.u32 [#allocation2], 4
      %s126 = int_to_ptr.vmem [resolvable:$true] %s125
      %128 = dma.vmem_to_hbm [thread:$0]  %s126, 128, %s6, [#allocation3]
    $region29: #{tpu_custom_call.1} parent=1 // pred_fallthru
      _
    // Predicated region
    $region30: #{tpu_custom_call.1} parent=1 // pred_check
      _
    $region31: #{tpu_custom_call.1} parent=1 // pred_check_branch
      %130 = sbr.rel (0) target = $region33
    $region32: #{tpu_custom_call.1} parent=1 // pred_region
      %131 = dma.done [#allocation3], 128
    $region33: #{tpu_custom_call.1} parent=1 // pred_fallthru
      _
    %132 = vsyncpa [#allocation3], 1

</llo_original>
